<compile_context>
chip_gen: v7x
topology: tpu7x:2x2x1
jax: 0.10.0
libtpu: 0.0.40
codegen_flags: <defaults>
</compile_context>

<pallas_src>
import math

import jax
import jax.numpy as jnp
from jax.experimental import pallas as pl
from jax.experimental.pallas import tpu as pltpu

_LOG_2PI = math.log(2.0 * math.pi)
_NEG_SLOPE = 0.01              # nn.LeakyReLU default negative_slope
_DOT_DTYPE = jnp.bfloat16      # MXU operand dtype (accumulation stays f32)
_BATCH_TILE = 512              # batch tile for the gridded large-batch path


def _round_up(x, m):
    return ((x + m - 1) // m) * m


# ----------------------------- Pallas kernel -------------------------------

def _make_fused_kernel(D, A):
    """Kernel over one batch tile.  Static dims D (raw feature width) and A (act_dim)."""

    def kernel(xe_ref, w1_ref, w2_ref, w3_ref, bls_ref, out_ref):
        # xe_ref : (bt, D_pad) f32   cols [0:D] raw features, [D:D+A] eps, rest zero
        # w1_ref : (D_pad, 3H) bf16  [aw1 | tw1 | rw1] with the missile-state Linear folded in;
        #                            zero rows for cols >= D
        # w2_ref : (3H, 3H)    bf16  block-diag(aw2, tw2, rw2)
        # w3_ref : (3H, A+2)   bf16  cols [0:A]<-aw3, [A]<-tw3, [A+1]<-rw3 (block layout)
        # bls_ref: (5, 3H)     f32   rows: b1 | b2 | b3(pad) | log_std(pad) | std(pad)
        # out_ref: (bt, OUT_PAD) f32 [mu | a | logp | ve | vi | 0-pad]
        x = xe_ref[...]                                  # f32
        xc = x.astype(w1_ref.dtype)                      # bf16 operand for MXU

        def leaky(v):
            return jnp.where(v > 0, v, _NEG_SLOPE * v)

        h1 = leaky(jnp.dot(xc, w1_ref[...],
                           preferred_element_type=jnp.float32) + bls_ref[0:1, :])
        h2 = leaky(jnp.dot(h1.astype(w2_ref.dtype), w2_ref[...],
                           preferred_element_type=jnp.float32) + bls_ref[1:2, :])
        z3 = (jnp.dot(h2.astype(w3_ref.dtype), w3_ref[...],
                      preferred_element_type=jnp.float32)
              + bls_ref[2:3, 0:A + 2])                   # (bt, A+2)

        mu = jnp.tanh(z3[:, 0:A])                        # actor head (Tanh output act)
        ve = z3[:, A:A + 1]                              # v_task head
        vi = z3[:, A + 1:A + 2]                          # v_rnd head

        log_std = bls_ref[3:4, 0:A]                      # (1, A)
        std = bls_ref[4:5, 0:A]                          # precomputed exp(log_std)
        eps = x[:, D:D + A]                              # f32 standard-normal noise
        a = mu + std * eps                               # Normal(mu, std).sample()

        # Normal log_prob(a).sum(-1); since a = mu + std*eps, z == eps exactly.
        logp = (jnp.sum(-0.5 * eps * eps - log_std, axis=-1, keepdims=True)
                - 0.5 * A * _LOG_2PI)

        # Single lane-dense output slab; pad lanes zeroed once, heads written as slices.
        out_ref[...] = jnp.zeros_like(out_ref)
        out_ref[:, 0:A] = mu
        out_ref[:, A:2 * A] = a
        out_ref[:, 2 * A:2 * A + 1] = logp
        out_ref[:, 2 * A + 1:2 * A + 2] = ve
        out_ref[:, 2 * A + 2:2 * A + 3] = vi

    return kernel


# ------------------------------ Parameters ---------------------------------

def make_params(key, obs_dim_self, obs_dim_target, act_dim,
                state_embed_size, alert_embed_size, hidden=(64, 64),
                num_alert_embeddings=101):
    """Deterministic synthetic parameter init (shapes match the PyTorch module)."""
    D = obs_dim_self + obs_dim_target + 2 * alert_embed_size + 4 * state_embed_size
    H1, H2 = hidden
    assert H1 == H2, "fused packing below assumes equal hidden sizes (as in the module: (64, 64))"

    keys = jax.random.split(key, 32)
    kit = iter(keys)

    def lin(kin, kout):
        scale = 1.0 / math.sqrt(kin)
        w = jax.random.uniform(next(kit), (kin, kout), jnp.float32, -scale, scale)
        b = jax.random.uniform(next(kit), (1, kout), jnp.float32, -scale, scale)
        return w, b

    params = {}
    # MissileStateEmbedding: Linear(2 -> S)   # TODO(synk): source class not given; Linear assumed.
    params["ms_w"], params["ms_b"] = lin(2, state_embed_size)
    # AlertEmbeddingSimple: Embedding(101, Ea)
    params["alert_tbl"] = jax.random.normal(
        next(kit), (num_alert_embeddings, alert_embed_size), jnp.float32)

    # actor mu_net [D, H1, H2, A]
    params["a1"], params["a1b"] = lin(D, H1)
    params["a2"], params["a2b"] = lin(H1, H2)
    params["a3"], params["a3b"] = lin(H2, act_dim)
    # v_task [D, H1, H2, 1]
    params["t1"], params["t1b"] = lin(D, H1)
    params["t2"], params["t2b"] = lin(H1, H2)
    params["t3"], params["t3b"] = lin(H2, 1)
    # v_rnd [D, H1, H2, 1]
    params["r1"], params["r1b"] = lin(D, H1)
    params["r2"], params["r2b"] = lin(H1, H2)
    params["r3"], params["r3b"] = lin(H2, 1)
    # log_std = -0.5 * ones(act_dim)
    params["log_std"] = jnp.full((1, act_dim), -0.5, jnp.float32)
    return params, D


def pack_params(params, obs_dim_self, obs_dim_target, act_dim,
                state_embed_size, alert_embed_size):
    """Fuse the three towers (and the missile-state Linear) into 4 dense kernel operands."""
    Ds, Dt = obs_dim_self, obs_dim_target
    S, Ea, A = state_embed_size, alert_embed_size, act_dim
    H = params["a1"].shape[1]
    H3 = 3 * H
    D_raw = Ds + 8 + Dt + 2 * Ea           # raw features: obs_self | ms_raw(8) | obs_target | alert
    D_pad = _round_up(D_raw + A, 128)      # + eps columns, lane-aligned
    OUT_PAD = _round_up(2 * A + 3, 128)    # [mu | a | logp | ve | vi] lane-dense slab

    # Layer 1: side-by-side fusion of the three towers.
    w1 = jnp.concatenate([params["a1"], params["t1"], params["r1"]], axis=1)      # (D_full, 3H)
    b1 = jnp.concatenate([params["a1b"], params["t1b"], params["r1b"]], axis=1)   # (1, 3H)

    # Fold MissileStateEmbedding Linear(2->S), applied per missile, into layer 1 (f32, once).
    rows_self = w1[0:Ds]                                   # obs_self rows
    rows_ms = w1[Ds:Ds + 4 * S]                            # rows consuming the 4*S mis_state feats
    rows_rest = w1[Ds + 4 * S:]                            # obs_target + alert rows
    ms_block = jnp.kron(jnp.eye(4, dtype=jnp.float32), params["ms_w"])            # (8, 4S)
    w1_eff = jnp.concatenate([rows_self, ms_block @ rows_ms, rows_rest], axis=0)  # (D_raw, 3H)
    b1_eff = b1 + jnp.tile(params["ms_b"], (1, 4)) @ rows_ms                      # (1, 3H)

    # Zero rows for the eps / padding columns, then cast operand to bf16.
    w1_eff = jnp.pad(w1_eff, ((0, D_pad - D_raw), (0, 0))).astype(_DOT_DTYPE)     # (D_pad, 3H)

    # Layer 2: block-diagonal fusion.
    w2 = jnp.zeros((H3, H3), jnp.float32)
    w2 = w2.at[0:H, 0:H].set(params["a2"])
    w2 = w2.at[H:2 * H, H:2 * H].set(params["t2"])
    w2 = w2.at[2 * H:, 2 * H:].set(params["r2"])
    w2 = w2.astype(_DOT_DTYPE)

    # Layer 3: block layout -> (3H, A+2), cols [0:A]=actor, [A]=v_task, [A+1]=v_rnd.
    w3 = jnp.zeros((H3, A + 2), jnp.float32)
    w3 = w3.at[0:H, 0:A].set(params["a3"])
    w3 = w3.at[H:2 * H, A:A + 1].set(params["t3"])
    w3 = w3.at[2 * H:, A + 1:A + 2].set(params["r3"])
    w3 = w3.astype(_DOT_DTYPE)

    # Bias / log_std / std slab (kept in f32 — applied after f32 accumulation).
    b2 = jnp.concatenate([params["a2b"], params["t2b"], params["r2b"]], axis=1)   # (1, 3H)
    b3 = jnp.concatenate([params["a3b"], params["t3b"], params["r3b"]], axis=1)   # (1, A+2)
    b3 = jnp.pad(b3, ((0, 0), (0, H3 - (A + 2))))
    ls = jnp.pad(params["log_std"], ((0, 0), (0, H3 - A)))
    st = jnp.pad(jnp.exp(params["log_std"]), ((0, 0), (0, H3 - A)))
    bls = jnp.concatenate([b1_eff, b2, b3, ls, st], axis=0).astype(jnp.float32)   # (5, 3H)

    packed = {
        "w1": w1_eff, "w2": w2, "w3": w3, "bls": bls,
        "alert_tbl": params["alert_tbl"], "log_std": params["log_std"],
        # static dims (Python ints)
        "D": D_raw, "A": A, "D_pad": D_pad, "OUT_PAD": OUT_PAD,
    }
    return packed


# ------------------------------ JAX wrapper --------------------------------

def actor_two_critic_forward(packed, obs_self, obs_target,
                             missile_states, missile_alerts, sample_key):
    """Alert-embedding gather + concat as tiny XLA glue; fused towers + sampling + log-prob in Pallas."""
    B = obs_self.shape[0]
    D, A = packed["D"], packed["A"]
    D_pad, OUT_PAD = packed["D_pad"], packed["OUT_PAD"]

    # --- glue: alert embedding lookup (B,4,2)->(B,4,2,Ea), sum over missiles -> (B, 2Ea)
    # TODO(synk): data-dependent gather on a 101xEa table kept as XLA glue.
    mis_alert = jnp.take(packed["alert_tbl"], missile_alerts, axis=0)
    mis_alert = jnp.sum(mis_alert, axis=-3).reshape(B, -1)

    eps = jax.random.normal(sample_key, (B, A), jnp.float32)

    # One concat builds the padded kernel input slab.  The missile-state Linear(2->S)
    # is folded into W1, so raw missile states go in directly.
    xe = jnp.concatenate(
        [obs_self.astype(jnp.float32),
         missile_states.reshape(B, -1).astype(jnp.float32),
         obs_target.astype(jnp.float32),
         mis_alert.astype(jnp.float32),
         eps,
         jnp.zeros((B, D_pad - D - A), jnp.float32)], axis=-1)          # (B, D_pad)

    kernel = _make_fused_kernel(D, A)
    w1, w2, w3, bls = packed["w1"], packed["w2"], packed["w3"], packed["bls"]

    if B <= _BATCH_TILE:
        # Tiny/latency path: whole problem in VMEM, no grid (a grid would only add
        # per-step overhead at small B).
        vmem = pl.BlockSpec(memory_space=pltpu.MemorySpace.VMEM)
        out = pl.pallas_call(
            kernel,
            out_shape=jax.ShapeDtypeStruct((B, OUT_PAD), jnp.float32),
            in_specs=[vmem] * 5,
            out_specs=vmem,
        )(xe, w1, w2, w3, bls)
    else:
        # Large-batch rollout path: 1-D batch grid, weights VMEM-resident across steps.
        BT = _BATCH_TILE
        Bp = _round_up(B, BT)
        if Bp != B:
            xe = jnp.pad(xe, ((0, Bp - B), (0, 0)))
        const = lambda i: (0, 0)
        out = pl.pallas_call(
            kernel,
            out_shape=jax.ShapeDtypeStruct((Bp, OUT_PAD), jnp.float32),
            grid=(Bp // BT,),
            in_specs=[
                pl.BlockSpec((BT, D_pad), lambda i: (i, 0)),
                pl.BlockSpec(w1.shape, const),
                pl.BlockSpec(w2.shape, const),
                pl.BlockSpec(w3.shape, const),
                pl.BlockSpec(bls.shape, const),
            ],
            out_specs=pl.BlockSpec((BT, OUT_PAD), lambda i: (i, 0)),
            compiler_params=pltpu.CompilerParams(
                dimension_semantics=("parallel",)),
        )(xe, w1, w2, w3, bls)
        out = out[:B]

    mu = out[:, 0:A]
    a = out[:, A:2 * A]
    logp = out[:, 2 * A]
    ve = out[:, 2 * A + 1]
    vi = out[:, 2 * A + 2]
    std = jnp.exp(packed["log_std"][0])
    # (mu, std) describe pi = Normal(mu, std)
    return (mu, std), a, ve, vi, logp


# --------------------- pure-JAX reference (for checking) -------------------

def _reference_forward(params, obs_self, obs_target, missile_states, missile_alerts, eps):
    """Per-tower forward with module semantics, mimicking the kernel's bf16 matmul operands."""
    f32 = jnp.float32

    def q(v):  # mimic the kernel's bf16 operand cast (accumulation in f32)
        return v.astype(_DOT_DTYPE).astype(f32)

    B = obs_self.shape[0]
    mis_state = jnp.einsum("bmi,ie->bme", missile_states.astype(f32),
                           params["ms_w"]) + params["ms_b"][0]
    mis_state = mis_state.reshape(B, -1)
    mis_alert = jnp.take(params["alert_tbl"], missile_alerts, axis=0)
    mis_alert = jnp.sum(mis_alert, axis=-3).reshape(B, -1)
    x = jnp.concatenate([obs_self, mis_state, obs_target, mis_alert], axis=-1).astype(f32)

    def leaky(v):
        return jnp.where(v > 0, v, _NEG_SLOPE * v)

    def mlp(w1, b1, w2, b2, w3, b3):
        h = leaky(jnp.dot(q(x), q(w1)) + b1)
        h = leaky(jnp.dot(q(h), q(w2)) + b2)
        return jnp.dot(q(h), q(w3)) + b3

    mu = jnp.tanh(mlp(params["a1"], params["a1b"], params["a2"], params["a2b"],
                      params["a3"], params["a3b"]))
    ve = mlp(params["t1"], params["t1b"], params["t2"], params["t2b"],
             params["t3"], params["t3b"])[:, 0]
    vi = mlp(params["r1"], params["r1b"], params["r2"], params["r2b"],
             params["r3"], params["r3b"])[:, 0]
    std = jnp.exp(params["log_std"])
    a = mu + std * eps
    logp = jnp.sum(-0.5 * eps * eps - params["log_std"] - 0.5 * _LOG_2PI, axis=-1)
    return mu, a, ve, vi, logp


# --------------------------------- main -------------------------------------

if __name__ == "__main__":
    # Small, module-consistent shapes
    obs_dim_self, obs_dim_target, act_dim = 6, 5, 3
    state_embed_size, alert_embed_size = 4, 4
    B = 2

    root = jax.random.PRNGKey(0)
    kp, k1, k2, k3, k4, ks = jax.random.split(root, 6)

    params, _ = make_params(kp, obs_dim_self, obs_dim_target, act_dim,
                            state_embed_size, alert_embed_size)
    packed = pack_params(params, obs_dim_self, obs_dim_target, act_dim,
                         state_embed_size, alert_embed_size)

    obs_self = jax.random.normal(k1, (B, obs_dim_self), jnp.float32)
    obs_target = jax.random.normal(k2, (B, obs_dim_target), jnp.float32)
    missile_states = jax.random.normal(k3, (B, 4, 2), jnp.float32)
    missile_alerts = jax.random.randint(k4, (B, 4, 2), 0, 101, jnp.int32)

    (mu, std), a, v_e, v_i, logp_a = actor_two_critic_forward(
        packed, obs_self, obs_target, missile_states, missile_alerts, ks)
    jax.block_until_ready((mu, a, v_e, v_i, logp_a))

    assert mu.shape == (B, act_dim)
    assert a.shape == (B, act_dim)
    assert v_e.shape == (B,)
    assert v_i.shape == (B,)
    assert logp_a.shape == (B,)

    # Cross-check against a plain-JAX per-tower reference (same noise, same operand rounding).
    eps = jax.random.normal(ks, (B, act_dim), jnp.float32)
    mu_r, a_r, ve_r, vi_r, lp_r = _reference_forward(
        params, obs_self, obs_target, missile_states, missile_alerts, eps)
    assert jnp.allclose(mu, mu_r, atol=2e-2, rtol=2e-2)
    assert jnp.allclose(a, a_r, atol=2e-2, rtol=2e-2)
    assert jnp.allclose(v_e, ve_r, atol=2e-2, rtol=2e-2)
    assert jnp.allclose(v_i, vi_r, atol=2e-2, rtol=2e-2)
    assert jnp.allclose(logp_a, lp_r, atol=2e-2, rtol=2e-2)

    print("KERNEL_OK")
</pallas_src>

<mosaic_0001>
module attributes {stable_mosaic.version = 11 : i64} {
  func.func @kernel(%arg0: memref<2x128xf32, #tpu.memory_space<vmem>>, %arg1: memref<128x192xbf16, #tpu.memory_space<vmem>>, %arg2: memref<192x192xbf16, #tpu.memory_space<vmem>>, %arg3: memref<192x5xbf16, #tpu.memory_space<vmem>>, %arg4: memref<5x192xf32, #tpu.memory_space<vmem>>, %arg5: memref<2x128xf32, #tpu.memory_space<vmem>>) attributes {dimension_semantics = [], scalar_prefetch = 0 : i64, scratch_operands = 0 : i64, tpu.core_type = #tpu.core_type<tc>} {
    %c0 = arith.constant 0 : index
    %c0_0 = arith.constant 0 : index
    %0 = vector.load %arg0[%c0, %c0_0] : memref<2x128xf32, #tpu.memory_space<vmem>>, vector<2x128xf32>
    %1 = arith.truncf %0 : vector<2x128xf32> to vector<2x128xbf16>
    %c0_1 = arith.constant 0 : index
    %c0_2 = arith.constant 0 : index
    %2 = vector.load %arg1[%c0_1, %c0_2] : memref<128x192xbf16, #tpu.memory_space<vmem>>, vector<128x192xbf16>
    %cst = arith.constant dense<0.000000e+00> : vector<2x192xf32>
    %3 = tpu.matmul %1, %2, %cst {dimension_numbers = #tpu.dot_dimension_numbers<[1], [0], [0], [1], [0, 0, 1, 1], [], []>} : vector<2x128xbf16>, vector<128x192xbf16>, vector<2x192xf32> -> vector<2x192xf32>
    %c0_3 = arith.constant 0 : index
    %c0_4 = arith.constant 0 : index
    %4 = vector.load %arg4[%c0_3, %c0_4] : memref<5x192xf32, #tpu.memory_space<vmem>>, vector<1x192xf32>
    %5 = vector.broadcast %4 : vector<1x192xf32> to vector<2x192xf32>
    %6 = arith.addf %3, %5 : vector<2x192xf32>
    %cst_5 = arith.constant 0.000000e+00 : f32
    %7 = vector.broadcast %cst_5 : f32 to vector<2x192xf32>
    %8 = arith.cmpf ogt, %6, %7 : vector<2x192xf32>
    %cst_6 = arith.constant 0.00999999977 : f32
    %9 = vector.broadcast %cst_6 : f32 to vector<2x192xf32>
    %10 = arith.mulf %9, %6 : vector<2x192xf32>
    %11 = arith.select %8, %6, %10 : vector<2x192xi1>, vector<2x192xf32>
    %12 = arith.truncf %11 : vector<2x192xf32> to vector<2x192xbf16>
    %c0_7 = arith.constant 0 : index
    %c0_8 = arith.constant 0 : index
    %13 = vector.load %arg2[%c0_7, %c0_8] : memref<192x192xbf16, #tpu.memory_space<vmem>>, vector<192x192xbf16>
    %cst_9 = arith.constant dense<0.000000e+00> : vector<2x192xf32>
    %14 = tpu.matmul %12, %13, %cst_9 {dimension_numbers = #tpu.dot_dimension_numbers<[1], [0], [0], [1], [0, 0, 1, 1], [], []>} : vector<2x192xbf16>, vector<192x192xbf16>, vector<2x192xf32> -> vector<2x192xf32>
    %c1 = arith.constant 1 : index
    %c0_10 = arith.constant 0 : index
    %15 = vector.load %arg4[%c1, %c0_10] : memref<5x192xf32, #tpu.memory_space<vmem>>, vector<1x192xf32>
    %16 = vector.broadcast %15 : vector<1x192xf32> to vector<2x192xf32>
    %17 = arith.addf %14, %16 : vector<2x192xf32>
    %cst_11 = arith.constant 0.000000e+00 : f32
    %18 = vector.broadcast %cst_11 : f32 to vector<2x192xf32>
    %19 = arith.cmpf ogt, %17, %18 : vector<2x192xf32>
    %cst_12 = arith.constant 0.00999999977 : f32
    %20 = vector.broadcast %cst_12 : f32 to vector<2x192xf32>
    %21 = arith.mulf %20, %17 : vector<2x192xf32>
    %22 = arith.select %19, %17, %21 : vector<2x192xi1>, vector<2x192xf32>
    %23 = arith.truncf %22 : vector<2x192xf32> to vector<2x192xbf16>
    %c0_13 = arith.constant 0 : index
    %c0_14 = arith.constant 0 : index
    %24 = vector.load %arg3[%c0_13, %c0_14] : memref<192x5xbf16, #tpu.memory_space<vmem>>, vector<192x5xbf16>
    %cst_15 = arith.constant dense<0.000000e+00> : vector<2x5xf32>
    %25 = tpu.matmul %23, %24, %cst_15 {dimension_numbers = #tpu.dot_dimension_numbers<[1], [0], [0], [1], [0, 0, 1, 1], [], []>} : vector<2x192xbf16>, vector<192x5xbf16>, vector<2x5xf32> -> vector<2x5xf32>
    %c2 = arith.constant 2 : index
    %c0_16 = arith.constant 0 : index
    %26 = vector.load %arg4[%c2, %c0_16] : memref<5x192xf32, #tpu.memory_space<vmem>>, vector<1x5xf32>
    %27 = vector.broadcast %26 : vector<1x5xf32> to vector<2x5xf32>
    %28 = arith.addf %25, %27 : vector<2x5xf32>
    %29 = vector.extract_strided_slice %28 {offsets = [0, 0], sizes = [2, 3], strides = [1, 1]} : vector<2x5xf32> to vector<2x3xf32>
    %30 = math.tanh %29 : vector<2x3xf32>
    %31 = vector.extract_strided_slice %28 {offsets = [0, 3], sizes = [2, 1], strides = [1, 1]} : vector<2x5xf32> to vector<2x1xf32>
    %32 = vector.extract_strided_slice %28 {offsets = [0, 4], sizes = [2, 1], strides = [1, 1]} : vector<2x5xf32> to vector<2x1xf32>
    %c3 = arith.constant 3 : index
    %c0_17 = arith.constant 0 : index
    %33 = vector.load %arg4[%c3, %c0_17] : memref<5x192xf32, #tpu.memory_space<vmem>>, vector<1x3xf32>
    %c4 = arith.constant 4 : index
    %c0_18 = arith.constant 0 : index
    %34 = vector.load %arg4[%c4, %c0_18] : memref<5x192xf32, #tpu.memory_space<vmem>>, vector<1x3xf32>
    %35 = vector.extract_strided_slice %0 {offsets = [0, 27], sizes = [2, 3], strides = [1, 1]} : vector<2x128xf32> to vector<2x3xf32>
    %36 = vector.broadcast %34 : vector<1x3xf32> to vector<2x3xf32>
    %37 = arith.mulf %36, %35 : vector<2x3xf32>
    %38 = arith.addf %30, %37 : vector<2x3xf32>
    %cst_19 = arith.constant -5.000000e-01 : f32
    %39 = vector.broadcast %cst_19 : f32 to vector<2x3xf32>
    %40 = arith.mulf %39, %35 : vector<2x3xf32>
    %41 = arith.mulf %40, %35 : vector<2x3xf32>
    %42 = vector.broadcast %33 : vector<1x3xf32> to vector<2x3xf32>
    %43 = arith.subf %41, %42 : vector<2x3xf32>
    %cst_20 = arith.constant dense<0.000000e+00> : vector<2xf32>
    %44 = vector.multi_reduction <add>, %43, %cst_20 [1] : vector<2x3xf32> to vector<2xf32>
    %45 = vector.shape_cast %44 : vector<2xf32> to vector<2x1xf32>
    %cst_21 = arith.constant 2.75681567 : f32
    %46 = vector.broadcast %cst_21 : f32 to vector<2x1xf32>
    %47 = arith.subf %45, %46 : vector<2x1xf32>
    %cst_22 = arith.constant 0.000000e+00 : f32
    %48 = vector.broadcast %cst_22 : f32 to vector<2x128xf32>
    %c0_23 = arith.constant 0 : index
    %c0_24 = arith.constant 0 : index
    %49 = vector.load %arg5[%c0_23, %c0_24] : memref<2x128xf32, #tpu.memory_space<vmem>>, vector<2x128xf32>
    tpu.vector_store %arg5[%c0_23, %c0_24], %48 {strides = array<i32>} : memref<2x128xf32, #tpu.memory_space<vmem>>, vector<2x128xf32>,
    %c0_25 = arith.constant 0 : index
    %c0_26 = arith.constant 0 : index
    %50 = vector.load %arg5[%c0_25, %c0_26] : memref<2x128xf32, #tpu.memory_space<vmem>>, vector<2x3xf32>
    tpu.vector_store %arg5[%c0_25, %c0_26], %30 {strides = array<i32>} : memref<2x128xf32, #tpu.memory_space<vmem>>, vector<2x3xf32>,
    %c0_27 = arith.constant 0 : index
    %c3_28 = arith.constant 3 : index
    %51 = vector.load %arg5[%c0_27, %c3_28] : memref<2x128xf32, #tpu.memory_space<vmem>>, vector<2x3xf32>
    tpu.vector_store %arg5[%c0_27, %c3_28], %38 {strides = array<i32>} : memref<2x128xf32, #tpu.memory_space<vmem>>, vector<2x3xf32>,
    %c0_29 = arith.constant 0 : index
    %c6 = arith.constant 6 : index
    %52 = vector.load %arg5[%c0_29, %c6] : memref<2x128xf32, #tpu.memory_space<vmem>>, vector<2x1xf32>
    tpu.vector_store %arg5[%c0_29, %c6], %47 {strides = array<i32>} : memref<2x128xf32, #tpu.memory_space<vmem>>, vector<2x1xf32>,
    %c0_30 = arith.constant 0 : index
    %c7 = arith.constant 7 : index
    %53 = vector.load %arg5[%c0_30, %c7] : memref<2x128xf32, #tpu.memory_space<vmem>>, vector<2x1xf32>
    tpu.vector_store %arg5[%c0_30, %c7], %31 {strides = array<i32>} : memref<2x128xf32, #tpu.memory_space<vmem>>, vector<2x1xf32>,
    %c0_31 = arith.constant 0 : index
    %c8 = arith.constant 8 : index
    %54 = vector.load %arg5[%c0_31, %c8] : memref<2x128xf32, #tpu.memory_space<vmem>>, vector<2x1xf32>
    tpu.vector_store %arg5[%c0_31, %c8], %32 {strides = array<i32>} : memref<2x128xf32, #tpu.memory_space<vmem>>, vector<2x1xf32>,
    return
  }
}

</mosaic_0001>

<llo_original>
// kernel: tpu_custom_call.1
$region0: #{tpu_custom_call.1}
  #allocation0 [shape = 'u32[]', space=smem, size = 0x4, offset = 0x4, fixed_abs, tag = 'smem constant byte address 0x4 - core index']
  #allocation1 [shape = 'u32[144,128]{1,0:T(1,128)}', space=vmem, size = 0x12000, scoped, tag = 'internal scratch']
  %s0 = inlined_call_operand.vmem [shape: f32[2,128], index: 0, kind: input, shape index: {}]
  %s1 = inlined_call_operand.vmem [shape: bf16[128,192], index: 1, kind: input, shape index: {}]
  %s2 = inlined_call_operand.vmem [shape: bf16[192,192], index: 2, kind: input, shape index: {}]
  %s3 = inlined_call_operand.vmem [shape: bf16[192,5], index: 3, kind: input, shape index: {}]
  %s4 = inlined_call_operand.vmem [shape: f32[5,192], index: 4, kind: input, shape index: {}]
  %s5 = inlined_call_operand.hbm [shape: f32[2,128], index: 5, kind: output, shape index: {}]
  %s6 = sld [smem:[#allocation0]]
  $region30: #{tpu_custom_call.1} parent=0
    _
  %s8 = ssub.s32 1, %s6
  %s9 = scalar_select 0, %s8, %s6
  $region1: #{tpu_custom_call.1} parent=0
    #allocation2 [shape = 'u8[1024]{0}', space=vmem, size = 0x400, scoped, tag = 'output window, operand 0, single buffered']
    #allocation3 [shape = 's32[1]{0}', space=sflag, size = 0x4, scoped, tag = 'scoped memory for tpu_custom_call.1']
    %10 = vsyncpa [#allocation3], 0
    // Predicated region
    $region2: #{tpu_custom_call.1} parent=1 // pred_check
      _
    $region3: #{tpu_custom_call.1} parent=1 // pred_check_branch
      %12 = sbr.rel (0) target = $region5
    $region4: #{tpu_custom_call.1} parent=1 // pred_region
      _
    $region5: #{tpu_custom_call.1} parent=1 // pred_fallthru
      _
    // Predicated region
    $region6: #{tpu_custom_call.1} parent=1 // pred_check
      _
    $region7: #{tpu_custom_call.1} parent=1 // pred_check_branch
      %14 = sbr.rel (0) target = $region9
    $region8: #{tpu_custom_call.1} parent=1 // pred_region
      _
    $region9: #{tpu_custom_call.1} parent=1 // pred_fallthru
      _
    // Predicated region
    $region10: #{tpu_custom_call.1} parent=1 // pred_check
      _
    $region11: #{tpu_custom_call.1} parent=1 // pred_check_branch
      %16 = sbr.rel (0) target = $region13
    $region12: #{tpu_custom_call.1} parent=1 // pred_region
      _
    $region13: #{tpu_custom_call.1} parent=1 // pred_fallthru
      _
    // Predicated region
    $region14: #{tpu_custom_call.1} parent=1 // pred_check
      _
    $region15: #{tpu_custom_call.1} parent=1 // pred_check_branch
      %18 = sbr.rel (0) target = $region17
    $region16: #{tpu_custom_call.1} parent=1 // pred_region
      _
    $region17: #{tpu_custom_call.1} parent=1 // pred_fallthru
      _
    // Predicated region
    $region18: #{tpu_custom_call.1} parent=1 // pred_check
      _
    $region19: #{tpu_custom_call.1} parent=1 // pred_check_branch
      %20 = sbr.rel (0) target = $region21
    $region20: #{tpu_custom_call.1} parent=1 // pred_region
      _
    $region21: #{tpu_custom_call.1} parent=1 // pred_fallthru
      _
    %v22 = vld [vmem:[%s0] sm:$0x3]
    %v23 = vpack.c.bf16 %v22, %v22
    %v24 = vld [vmem:[%s1] sm:$0xff]
    %v25 = vld [vmem:[%s1 + $0x8] sm:$0xff]
    %v26 = vld [vmem:[%s1 + $0x10] sm:$0xff]
    %v27 = vld [vmem:[%s1 + $0x18] sm:$0xff]
    %v28 = vld [vmem:[%s1 + $0x20] sm:$0xff]
    %v29 = vld [vmem:[%s1 + $0x28] sm:$0xff]
    %v30 = vld [vmem:[%s1 + $0x30] sm:$0xff]
    %v31 = vld [vmem:[%s1 + $0x38] sm:$0xff]
    %v32 = vld [vmem:[%s1 + $0x40] sm:$0xff]
    %v33 = vld [vmem:[%s1 + $0x48] sm:$0xff]
    %v34 = vld [vmem:[%s1 + $0x50] sm:$0xff]
    %v35 = vld [vmem:[%s1 + $0x58] sm:$0xff]
    %v36 = vld [vmem:[%s1 + $0x60] sm:$0xff]
    %v37 = vld [vmem:[%s1 + $0x68] sm:$0xff]
    %v38 = vld [vmem:[%s1 + $0x70] sm:$0xff]
    %v39 = vld [vmem:[%s1 + $0x78] sm:$0xff]
    %v40 = vld [vmem:[%s4] ss:$8 sm:$0x3]
    %v42 = vlaneseq
    %v43 = vshrl.u32 %v42, 7
    %v44 = vsub.s32 0, %v43
    %v45 = vrot.slane %v40, %v44
    %v46 = vlaneseq
    %v47 = vshrl.u32 %v46, 7
    %v48 = vsub.s32 1, %v47
    %v49 = vrot.slane %v40, %v48
    %v68 = vunpack.c.l.b16 %v24
    %v69 = vunpack.c.h.b16 %v24
    %v70 = vunpack.c.l.b16 %v25
    %v71 = vunpack.c.h.b16 %v25
    %v72 = vunpack.c.l.b16 %v26
    %v73 = vunpack.c.h.b16 %v26
    %v74 = vunpack.c.l.b16 %v27
    %v75 = vunpack.c.h.b16 %v27
    %v76 = vunpack.c.l.b16 %v28
    %v77 = vunpack.c.h.b16 %v28
    %v78 = vunpack.c.l.b16 %v29
    %v79 = vunpack.c.h.b16 %v29
    %v80 = vunpack.c.l.b16 %v30
    %v81 = vunpack.c.h.b16 %v30
    %v82 = vunpack.c.l.b16 %v31
    %v83 = vunpack.c.h.b16 %v31
    %v84 = vunpack.c.l.b16 %v32
    %v85 = vunpack.c.h.b16 %v32
    %v86 = vunpack.c.l.b16 %v33
    %v87 = vunpack.c.h.b16 %v33
    %v88 = vunpack.c.l.b16 %v34
    %v89 = vunpack.c.h.b16 %v34
    %v90 = vunpack.c.l.b16 %v35
    %v91 = vunpack.c.h.b16 %v35
    %v92 = vunpack.c.l.b16 %v36
    %v93 = vunpack.c.h.b16 %v36
    %v94 = vunpack.c.l.b16 %v37
    %v95 = vunpack.c.h.b16 %v37
    %v96 = vunpack.c.l.b16 %v38
    %v97 = vunpack.c.h.b16 %v38
    %v98 = vunpack.c.l.b16 %v39
    %v99 = vunpack.c.h.b16 %v39
    %v100 = vpack.c.b16 %v70, %v68
    %v101 = vpack.c.b16 %v71, %v69
    %v102 = vpack.c.b16 %v74, %v72
    %v103 = vpack.c.b16 %v75, %v73
    %v104 = vpack.c.b16 %v78, %v76
    %v105 = vpack.c.b16 %v79, %v77
    %v106 = vpack.c.b16 %v82, %v80
    %v107 = vpack.c.b16 %v83, %v81
    %v108 = vpack.c.b16 %v86, %v84
    %v109 = vpack.c.b16 %v87, %v85
    %v110 = vpack.c.b16 %v90, %v88
    %v111 = vpack.c.b16 %v91, %v89
    %v112 = vpack.c.b16 %v94, %v92
    %v113 = vpack.c.b16 %v95, %v93
    %v114 = vpack.c.b16 %v98, %v96
    %v115 = vpack.c.b16 %v99, %v97
    %132 = vmatprep.subr.bf16.mxu0 %v101
    %133 = vmatpush1.bf16.msra.mxu0 %v100
    %134 = vmatprep.subr.bf16.mxu0 %v103
    %135 = vmatpush1.bf16.msra.mxu0 %v102
    %136 = vmatprep.subr.bf16.mxu0 %v105
    %137 = vmatpush1.bf16.msra.mxu0 %v104
    %138 = vmatprep.subr.bf16.mxu0 %v107
    %139 = vmatpush1.bf16.msra.mxu0 %v106
    %140 = vmatprep.subr.bf16.mxu0 %v109
    %141 = vmatpush1.bf16.msra.mxu0 %v108
    %142 = vmatprep.subr.bf16.mxu0 %v111
    %143 = vmatpush1.bf16.msra.mxu0 %v110
    %144 = vmatprep.subr.bf16.mxu0 %v113
    %145 = vmatpush1.bf16.msra.mxu0 %v112
    %146 = vmatprep.subr.bf16.mxu0 %v115
    %147 = vmatpush1.bf16.msra.mxu0 %v114
    %148 = vmatprep.subr.bf16.mxu0 0
    %149 = vmatpush1.bf16.msra.mxu0 0
    %150 = vmatprep.subr.bf16.mxu0 0
    %151 = vmatpush1.bf16.msra.mxu0 0
    %152 = vmatprep.subr.bf16.mxu0 0
    %153 = vmatpush1.bf16.msra.mxu0 0
    %154 = vmatprep.subr.bf16.mxu0 0
    %155 = vmatpush1.bf16.msra.mxu0 0
    %156 = vmatprep.subr.bf16.mxu0 0
    %157 = vmatpush1.bf16.msra.mxu0 0
    %158 = vmatprep.subr.bf16.mxu0 0
    %159 = vmatpush1.bf16.msra.mxu0 0
    %160 = vmatprep.subr.bf16.mxu0 0
    %161 = vmatpush1.bf16.msra.mxu0 0
    %162 = vmatprep.subr.bf16.mxu0 0
    %163 = vmatpush1.bf16.msra.mxu0 0
    %164 = vmatprep.mubr.bf16.mxu0 0
    %165 = vmatmul.mubr.bf16.gmra.mrb[0].mxu0 %v23
    %v166 = vpop.f32.mrb[0].mxu0
    %v167 = vadd.f32 %v45, %v166
    %v168 = vpop.f32.mrb[0].mxu0
    %v169 = vadd.f32 %v49, %v168
    %v170 = vpop.f32.mrb[0].mxu0
    %v171 = vpop.f32.mrb[0].mxu0
    %172 = vdwg.mxu0
    %vm173 = vcmp.gt.f32.partialorder %v167, 0.0
    %vm174 = vcmp.gt.f32.partialorder %v169, 0.0
    %v175 = vmul.f32 %v167, 0.01
    %v176 = vmul.f32 %v169, 0.01
    %v177 = vsel %vm173, %v167, %v175
    %v178 = vsel %vm174, %v169, %v176
    %v179 = vpack.c.bf16 %v177, %v177
    %v180 = vpack.c.bf16 %v178, %v178
    %v181 = vld [vmem:[%s2] sm:$0xff]
    %v182 = vld [vmem:[%s2 + $0x8] sm:$0xff]
    %v183 = vld [vmem:[%s2 + $0x10] sm:$0xff]
    %v184 = vld [vmem:[%s2 + $0x18] sm:$0xff]
    %v185 = vld [vmem:[%s2 + $0x20] sm:$0xff]
    %v186 = vld [vmem:[%s2 + $0x28] sm:$0xff]
    %v187 = vld [vmem:[%s2 + $0x30] sm:$0xff]
    %v188 = vld [vmem:[%s2 + $0x38] sm:$0xff]
    %v189 = vld [vmem:[%s2 + $0x40] sm:$0xff]
    %v190 = vld [vmem:[%s2 + $0x48] sm:$0xff]
    %v191 = vld [vmem:[%s2 + $0x50] sm:$0xff]
    %v192 = vld [vmem:[%s2 + $0x58] sm:$0xff]
    %v193 = vld [vmem:[%s2 + $0x60] sm:$0xff]
    %v194 = vld [vmem:[%s2 + $0x68] sm:$0xff]
    %v195 = vld [vmem:[%s2 + $0x70] sm:$0xff]
    %v196 = vld [vmem:[%s2 + $0x78] sm:$0xff]
    %v197 = vld [vmem:[%s2 + $0x80] sm:$0xff]
    %v198 = vld [vmem:[%s2 + $0x88] sm:$0xff]
    %v199 = vld [vmem:[%s2 + $0x90] sm:$0xff]
    %v200 = vld [vmem:[%s2 + $0x98] sm:$0xff]
    %v201 = vld [vmem:[%s2 + $0xa0] sm:$0xff]
    %v202 = vld [vmem:[%s2 + $0xa8] sm:$0xff]
    %v203 = vld [vmem:[%s2 + $0xb0] sm:$0xff]
    %v204 = vld [vmem:[%s2 + $0xb8] sm:$0xff]
    %s205 = scalar_lea.vmem %s4, 1
    %v206 = vld [vmem:[%s205] ss:$8 sm:$0x3]
    %v208 = vlaneseq
    %v209 = vshrl.u32 %v208, 7
    %v210 = vsub.s32 0, %v209
    %v211 = vrot.slane %v206, %v210
    %v212 = vlaneseq
    %v213 = vshrl.u32 %v212, 7
    %v214 = vsub.s32 1, %v213
    %v215 = vrot.slane %v206, %v214
    %v242 = vunpack.c.l.b16 %v181
    %v243 = vunpack.c.h.b16 %v181
    %v244 = vunpack.c.l.b16 %v182
    %v245 = vunpack.c.h.b16 %v182
    %v246 = vunpack.c.l.b16 %v183
    %v247 = vunpack.c.h.b16 %v183
    %v248 = vunpack.c.l.b16 %v184
    %v249 = vunpack.c.h.b16 %v184
    %v250 = vunpack.c.l.b16 %v185
    %v251 = vunpack.c.h.b16 %v185
    %v252 = vunpack.c.l.b16 %v186
    %v253 = vunpack.c.h.b16 %v186
    %v254 = vunpack.c.l.b16 %v187
    %v255 = vunpack.c.h.b16 %v187
    %v256 = vunpack.c.l.b16 %v188
    %v257 = vunpack.c.h.b16 %v188
    %v258 = vunpack.c.l.b16 %v189
    %v259 = vunpack.c.h.b16 %v189
    %v260 = vunpack.c.l.b16 %v190
    %v261 = vunpack.c.h.b16 %v190
    %v262 = vunpack.c.l.b16 %v191
    %v263 = vunpack.c.h.b16 %v191
    %v264 = vunpack.c.l.b16 %v192
    %v265 = vunpack.c.h.b16 %v192
    %v266 = vunpack.c.l.b16 %v193
    %v267 = vunpack.c.h.b16 %v193
    %v268 = vunpack.c.l.b16 %v194
    %v269 = vunpack.c.h.b16 %v194
    %v270 = vunpack.c.l.b16 %v195
    %v271 = vunpack.c.h.b16 %v195
    %v272 = vunpack.c.l.b16 %v196
    %v273 = vunpack.c.h.b16 %v196
    %v274 = vunpack.c.l.b16 %v197
    %v275 = vunpack.c.h.b16 %v197
    %v276 = vunpack.c.l.b16 %v198
    %v277 = vunpack.c.h.b16 %v198
    %v278 = vunpack.c.l.b16 %v199
    %v279 = vunpack.c.h.b16 %v199
    %v280 = vunpack.c.l.b16 %v200
    %v281 = vunpack.c.h.b16 %v200
    %v282 = vunpack.c.l.b16 %v201
    %v283 = vunpack.c.h.b16 %v201
    %v284 = vunpack.c.l.b16 %v202
    %v285 = vunpack.c.h.b16 %v202
    %v286 = vunpack.c.l.b16 %v203
    %v287 = vunpack.c.h.b16 %v203
    %v288 = vunpack.c.l.b16 %v204
    %v289 = vunpack.c.h.b16 %v204
    %v290 = vpack.c.b16 %v244, %v242
    %v291 = vpack.c.b16 %v245, %v243
    %v292 = vpack.c.b16 %v248, %v246
    %v293 = vpack.c.b16 %v249, %v247
    %v294 = vpack.c.b16 %v252, %v250
    %v295 = vpack.c.b16 %v253, %v251
    %v296 = vpack.c.b16 %v256, %v254
    %v297 = vpack.c.b16 %v257, %v255
    %v298 = vpack.c.b16 %v260, %v258
    %v299 = vpack.c.b16 %v261, %v259
    %v300 = vpack.c.b16 %v264, %v262
    %v301 = vpack.c.b16 %v265, %v263
    %v302 = vpack.c.b16 %v268, %v266
    %v303 = vpack.c.b16 %v269, %v267
    %v304 = vpack.c.b16 %v272, %v270
    %v305 = vpack.c.b16 %v273, %v271
    %v306 = vpack.c.b16 %v276, %v274
    %v307 = vpack.c.b16 %v277, %v275
    %v308 = vpack.c.b16 %v280, %v278
    %v309 = vpack.c.b16 %v281, %v279
    %v310 = vpack.c.b16 %v284, %v282
    %v311 = vpack.c.b16 %v285, %v283
    %v312 = vpack.c.b16 %v288, %v286
    %v313 = vpack.c.b16 %v289, %v287
    %vm338 = vcmask 523264
    %v340 = vsel %vm338, %v180, 0
    %342 = vmatprep.subr.bf16.mxu0 %v291
    %343 = vmatpush1.bf16.msra.mxu0 %v290
    %344 = vmatprep.subr.bf16.mxu0 %v293
    %345 = vmatpush1.bf16.msra.mxu0 %v292
    %346 = vmatprep.subr.bf16.mxu0 %v295
    %347 = vmatpush1.bf16.msra.mxu0 %v294
    %348 = vmatprep.subr.bf16.mxu0 %v297
    %349 = vmatpush1.bf16.msra.mxu0 %v296
    %350 = vmatprep.subr.bf16.mxu0 %v299
    %351 = vmatpush1.bf16.msra.mxu0 %v298
    %352 = vmatprep.subr.bf16.mxu0 %v301
    %353 = vmatpush1.bf16.msra.mxu0 %v300
    %354 = vmatprep.subr.bf16.mxu0 %v303
    %355 = vmatpush1.bf16.msra.mxu0 %v302
    %356 = vmatprep.subr.bf16.mxu0 %v305
    %357 = vmatpush1.bf16.msra.mxu0 %v304
    %358 = vmatprep.subr.bf16.mxu0 %v307
    %359 = vmatpush1.bf16.msra.mxu0 %v306
    %360 = vmatprep.subr.bf16.mxu0 %v309
    %361 = vmatpush1.bf16.msra.mxu0 %v308
    %362 = vmatprep.subr.bf16.mxu0 %v311
    %363 = vmatpush1.bf16.msra.mxu0 %v310
    %364 = vmatprep.subr.bf16.mxu0 %v313
    %365 = vmatpush1.bf16.msra.mxu0 %v312
    %366 = vmatprep.subr.bf16.mxu0 0
    %367 = vmatpush1.bf16.msra.mxu0 0
    %368 = vmatprep.subr.bf16.mxu0 0
    %369 = vmatpush1.bf16.msra.mxu0 0
    %370 = vmatprep.subr.bf16.mxu0 0
    %371 = vmatpush1.bf16.msra.mxu0 0
    %372 = vmatprep.subr.bf16.mxu0 0
    %373 = vmatpush1.bf16.msra.mxu0 0
    %374 = vmatprep.mubr.bf16.mxu0 %v340
    %375 = vmatmul.mubr.bf16.gmra.mrb[0].mxu0 %v179
    %v376 = vpop.f32.mrb[0].mxu0
    %v377 = vadd.f32 %v211, %v376
    %v378 = vpop.f32.mrb[0].mxu0
    %v379 = vadd.f32 %v215, %v378
    %v380 = vpop.f32.mrb[0].mxu0
    %v381 = vpop.f32.mrb[0].mxu0
    %382 = vdwg.mxu0
    %vm383 = vcmp.gt.f32.partialorder %v377, 0.0
    %vm384 = vcmp.gt.f32.partialorder %v379, 0.0
    %v385 = vmul.f32 %v377, 0.01
    %v386 = vmul.f32 %v379, 0.01
    %v387 = vsel %vm383, %v377, %v385
    %v388 = vsel %vm384, %v379, %v386
    %v389 = vpack.c.bf16 %v387, %v387
    %v390 = vpack.c.bf16 %v388, %v388
    %v391 = vld [vmem:[%s3] sm:$0xf]
    %v392 = vld [vmem:[%s3 + $0x4] sm:$0xf]
    %v393 = vld [vmem:[%s3 + $0x8] sm:$0xf]
    %v394 = vld [vmem:[%s3 + $0xc] sm:$0xf]
    %v395 = vld [vmem:[%s3 + $0x10] sm:$0xf]
    %v396 = vld [vmem:[%s3 + $0x14] sm:$0xf]
    %v397 = vld [vmem:[%s3 + $0x18] sm:$0xf]
    %v398 = vld [vmem:[%s3 + $0x1c] sm:$0xf]
    %v399 = vld [vmem:[%s3 + $0x20] sm:$0xf]
    %v400 = vld [vmem:[%s3 + $0x24] sm:$0xf]
    %v401 = vld [vmem:[%s3 + $0x28] sm:$0xf]
    %v402 = vld [vmem:[%s3 + $0x2c] sm:$0xf]
    %v403 = vld [vmem:[%s3 + $0x30] sm:$0xf]
    %v404 = vld [vmem:[%s3 + $0x34] sm:$0xf]
    %v405 = vld [vmem:[%s3 + $0x38] sm:$0xf]
    %v406 = vld [vmem:[%s3 + $0x3c] sm:$0xf]
    %v407 = vld [vmem:[%s3 + $0x40] sm:$0xf]
    %v408 = vld [vmem:[%s3 + $0x44] sm:$0xf]
    %v409 = vld [vmem:[%s3 + $0x48] sm:$0xf]
    %v410 = vld [vmem:[%s3 + $0x4c] sm:$0xf]
    %v411 = vld [vmem:[%s3 + $0x50] sm:$0xf]
    %v412 = vld [vmem:[%s3 + $0x54] sm:$0xf]
    %v413 = vld [vmem:[%s3 + $0x58] sm:$0xf]
    %v414 = vld [vmem:[%s3 + $0x5c] sm:$0xf]
    %v415 = vld [vmem:[%s4 + $0x2] ss:$0 sm:$0xff]
    %v440 = vunpack.c.l.b16 %v391
    %v441 = vunpack.c.l.b16 %v392
    %v442 = vunpack.c.l.b16 %v393
    %v443 = vunpack.c.l.b16 %v394
    %v444 = vunpack.c.l.b16 %v395
    %v445 = vunpack.c.l.b16 %v396
    %v446 = vunpack.c.l.b16 %v397
    %v447 = vunpack.c.l.b16 %v398
    %v448 = vunpack.c.l.b16 %v399
    %v449 = vunpack.c.l.b16 %v400
    %v450 = vunpack.c.l.b16 %v401
    %v451 = vunpack.c.l.b16 %v402
    %v452 = vunpack.c.l.b16 %v403
    %v453 = vunpack.c.l.b16 %v404
    %v454 = vunpack.c.l.b16 %v405
    %v455 = vunpack.c.l.b16 %v406
    %v456 = vunpack.c.l.b16 %v407
    %v457 = vunpack.c.l.b16 %v408
    %v458 = vunpack.c.l.b16 %v409
    %v459 = vunpack.c.l.b16 %v410
    %v460 = vunpack.c.l.b16 %v411
    %v461 = vunpack.c.l.b16 %v412
    %v462 = vunpack.c.l.b16 %v413
    %v463 = vunpack.c.l.b16 %v414
    %v464 = vpack.c.b16 %v441, %v440
    %v465 = vpack.c.b16 %v443, %v442
    %v466 = vpack.c.b16 %v445, %v444
    %v467 = vpack.c.b16 %v447, %v446
    %v468 = vpack.c.b16 %v449, %v448
    %v469 = vpack.c.b16 %v451, %v450
    %v470 = vpack.c.b16 %v453, %v452
    %v471 = vpack.c.b16 %v455, %v454
    %v472 = vpack.c.b16 %v457, %v456
    %v473 = vpack.c.b16 %v459, %v458
    %v474 = vpack.c.b16 %v461, %v460
    %v475 = vpack.c.b16 %v463, %v462
    %v489 = vsel %vm338, %v390, 0
    %491 = vmatprep.subr.bf16.mxu0 0
    %492 = vmatpush1.bf16.msra.mxu0 %v464
    %493 = vmatprep.subr.bf16.mxu0 0
    %494 = vmatpush1.bf16.msra.mxu0 %v465
    %495 = vmatprep.subr.bf16.mxu0 0
    %496 = vmatpush1.bf16.msra.mxu0 %v466
    %497 = vmatprep.subr.bf16.mxu0 0
    %498 = vmatpush1.bf16.msra.mxu0 %v467
    %499 = vmatprep.subr.bf16.mxu0 0
    %500 = vmatpush1.bf16.msra.mxu0 %v468
    %501 = vmatprep.subr.bf16.mxu0 0
    %502 = vmatpush1.bf16.msra.mxu0 %v469
    %503 = vmatprep.subr.bf16.mxu0 0
    %504 = vmatpush1.bf16.msra.mxu0 %v470
    %505 = vmatprep.subr.bf16.mxu0 0
    %506 = vmatpush1.bf16.msra.mxu0 %v471
    %507 = vmatprep.subr.bf16.mxu0 0
    %508 = vmatpush1.bf16.msra.mxu0 %v472
    %509 = vmatprep.subr.bf16.mxu0 0
    %510 = vmatpush1.bf16.msra.mxu0 %v473
    %511 = vmatprep.subr.bf16.mxu0 0
    %512 = vmatpush1.bf16.msra.mxu0 %v474
    %513 = vmatprep.subr.bf16.mxu0 0
    %514 = vmatpush1.bf16.msra.mxu0 %v475
    %515 = vmatprep.subr.bf16.mxu0 0
    %516 = vmatpush1.bf16.msra.mxu0 0
    %517 = vmatprep.subr.bf16.mxu0 0
    %518 = vmatpush1.bf16.msra.mxu0 0
    %519 = vmatprep.subr.bf16.mxu0 0
    %520 = vmatpush1.bf16.msra.mxu0 0
    %521 = vmatprep.subr.bf16.mxu0 0
    %522 = vmatpush1.bf16.msra.mxu0 0
    %523 = vmatprep.mubr.bf16.mxu0 %v489
    %524 = vmatmul.mubr.bf16.gmra.mrb[0].mxu0 %v389
    %v525 = vpop.f32.mrb[0].mxu0
    %v526 = vadd.f32 %v415, %v525
    %v527 = vpop.f32.mrb[0].mxu0
    %v528 = vpop.f32.mrb[0].mxu0
    %v529 = vpop.f32.mrb[0].mxu0
    %530 = vdwg.mxu0
    %v531 = vtanh.pop %v526
    %v532 = vld [vmem:[%s4 + $0x3] ss:$0 sm:$0xff]
    %v533 = vld [vmem:[%s4 + $0x4] ss:$0 sm:$0xff]
    %535 = vrot.lane.b32.xlu0 %v22, 101
    %v536 = vpop.permute.xlu0 %535
    %v538 = vmul.f32 %v533, %v536
    %v539 = vadd.f32 %v531, %v538
    %v540 = vmul.f32 %v22, -0.5
    %v541 = vmul.f32 %v540, %v22
    %543 = vrot.lane.b32.xlu0 %v532, 27
    %v544 = vpop.permute.xlu0 %543
    %v546 = vsub.f32 %v541, %v544
    %548 = vrot.lane.b32.xlu0 %v546, 101
    %v549 = vpop.permute.xlu0 %548
    %vm551 = vcmask 17408
    %v552 = vsel %vm551, %v549, 0.0
    %553 = vadd.xlane.f32.xlu0 %v552
    %v554 = vpop.xlane.xlu0 %553
    %v555 = vsub.f32 %v554, 2.7568157
    %556 = vst [vmem:[#allocation2] sm:$0x3] 0.0
    %557 = vst.msk [vmem:[#allocation2] sm:$0x3] %vm551, %v531
    %559 = vrot.lane.b32.xlu0 %v539, 3
    %v560 = vpop.permute.xlu0 %559
    %vm562 = vcmask 42008
    %563 = vst.msk [vmem:[#allocation2] sm:$0x3] %vm562, %v560
    %vm564 = vcmask 50224
    %565 = vst.msk [vmem:[#allocation2] sm:$0x3] %vm564, %v555
    %567 = vrot.lane.b32.xlu0 %v526, 4
    %v568 = vpop.permute.xlu0 %567
    %vm570 = vcmask 58424
    %571 = vst.msk [vmem:[#allocation2] sm:$0x3] %vm570, %v568
    %vm572 = vcmask 66624
    %573 = vst.msk [vmem:[#allocation2] sm:$0x3] %vm572, %v568
    // Predicated region
    $region22: #{tpu_custom_call.1} parent=1 // pred_check
      _
    $region23: #{tpu_custom_call.1} parent=1 // pred_check_branch
      %575 = sbr.rel (0) target = $region25
    $region24: #{tpu_custom_call.1} parent=1 // pred_region
      %s577 = ssub.s32 32, 32
      %578 = vsyncadd [#allocation3], %s577
      %s580 = sshll.u32 [#allocation2], 4
      %s581 = int_to_ptr.vmem [resolvable:$true] %s580
      %583 = dma.vmem_to_hbm [thread:$0]  %s581, 32, %s5, [#allocation3]
    $region25: #{tpu_custom_call.1} parent=1 // pred_fallthru
      _
    // Predicated region
    $region26: #{tpu_custom_call.1} parent=1 // pred_check
      _
    $region27: #{tpu_custom_call.1} parent=1 // pred_check_branch
      %585 = sbr.rel (0) target = $region29
    $region28: #{tpu_custom_call.1} parent=1 // pred_region
      %586 = dma.done [#allocation3], 32
    $region29: #{tpu_custom_call.1} parent=1 // pred_fallthru
      _
    %587 = vsyncpa [#allocation3], 1

</llo_original>
